<compile_context>
chip_gen: v5e
topology: v5e:2x2
jax: 0.10.0
libtpu: 0.0.40
codegen_flags: <defaults>
</compile_context>

<pallas_src>
import functools

import jax
import jax.numpy as jnp
from jax.experimental import pallas as pl
from jax.experimental.pallas import tpu as pltpu

LANES = 128  # vreg lane width == packed output slab width


def _cdiv(a, b):
    return -(-a // b)


def _round_up(x, m):
    return _cdiv(x, m) * m


def _choose_tile_b(B, max_tile=1024, align=16):
    """Tile size: up to 1024 rows, multiple of 16 (bf16 sublane packing),
    bounded padding waste, and >= 2 grid steps when the batch allows it so
    the 'parallel' batch axis shards across both v7x TensorCores."""
    n_steps = max(1, _cdiv(B, max_tile))
    if B > align:
        n_steps = max(n_steps, 2)
    tile = _round_up(_cdiv(B, n_steps), align)
    return min(tile, _round_up(max_tile, align))


def actor_kernel(obs_ref, act_ref,
                 w1_ref, b1_ref, w2_ref, b2_ref, w3_ref, b3_ref,
                 out_ref, *, act_dim):
    x = obs_ref[...]                                      # (TB, obs_dim) bf16

    # ---- MLP hot path: bf16 MXU matmuls (f32 accumulate), f32 elementwise --
    h1 = jnp.tanh(
        jnp.dot(x, w1_ref[...], preferred_element_type=jnp.float32)
        + b1_ref[...])
    h2 = jnp.tanh(
        jnp.dot(h1.astype(jnp.bfloat16), w2_ref[...],
                preferred_element_type=jnp.float32) + b2_ref[...])
    # w3/b3 are padded to 128 lanes; padding lanes get logits ~= -1e9.
    logits = (jnp.dot(h2.astype(jnp.bfloat16), w3_ref[...],
                      preferred_element_type=jnp.float32) + b3_ref[...])

    # ---- Categorical(logits): stable stats without logp_all / p tensors ----
    m = jnp.max(logits, axis=-1, keepdims=True)
    z = logits - m
    e = jnp.exp(z)                                        # padded lanes -> 0
    s = jnp.sum(e, axis=-1, keepdims=True)
    lse = jnp.log(s)

    col = jax.lax.broadcasted_iota(jnp.int32, logits.shape, 1)
    onehot = (col == act_ref[...]).astype(jnp.float32)    # act: (TB, 1) int32
    logp = jnp.sum(onehot * z, axis=-1, keepdims=True) - lse
    # entropy = lse - sum(p * z); exact reciprocal (feeds the PPO loss).
    ent = lse - jnp.sum(e * z, axis=-1, keepdims=True) / s

    # ---- pack lane-dense output slab: [logits | logp | ent | zeros] ----
    slab = jnp.where(col < act_dim, logits, 0.0)
    slab = jnp.where(col == act_dim, logp, slab)
    slab = jnp.where(col == act_dim + 1, ent, slab)
    out_ref[...] = slab                                   # one unmasked store


def prepare_params(params):
    """One-time weight prep (hoist out of the per-rollout-step hot path):
    bf16 weights for the MXU, last layer padded to the 128-lane slab width."""
    w1, b1, w2, b2, w3, b3 = params
    H2, A = w3.shape
    assert A + 2 <= LANES, "act_dim must fit in the packed 128-lane output"
    w1b = w1.astype(jnp.bfloat16)
    w2b = w2.astype(jnp.bfloat16)
    w3p = jnp.zeros((H2, LANES), jnp.bfloat16).at[:, :A].set(
        w3.astype(jnp.bfloat16))
    # Finite -1e9 (NOT -inf): exp underflows to 0 and 0 * finite = 0.
    b3p = jnp.full((1, LANES), -1e9, jnp.float32).at[:, :A].set(b3)
    return (w1b, b1, w2b, b2, w3p, b3p), A


@functools.partial(jax.jit, static_argnames=("act_dim",))
def actor_forward_packed(obs, act, prepped, *, act_dim):
    """Hot path: returns the packed (Bp, 128) f32 slab
    [logits(0..A-1) | logp(A) | entropy(A+1) | zeros]. Slice lazily in the
    consumer (e.g. inside the jitted PPO loss) to avoid an extra HBM trip."""
    w1b, b1, w2b, b2, w3p, b3p = prepped
    B, obs_dim = obs.shape

    obs = obs.astype(jnp.bfloat16)            # halve obs DMA bytes
    act = act.reshape(B, 1).astype(jnp.int32)

    TILE_B = _choose_tile_b(B)
    Bp = _round_up(B, TILE_B)
    if Bp != B:
        obs = jnp.pad(obs, ((0, Bp - B), (0, 0)))
        act = jnp.pad(act, ((0, Bp - B), (0, 0)))
    grid = (Bp // TILE_B,)

    def resident(arr):
        return pl.BlockSpec(arr.shape, lambda i: (0,) * arr.ndim)

    return pl.pallas_call(
        functools.partial(actor_kernel, act_dim=act_dim),
        grid=grid,
        out_shape=jax.ShapeDtypeStruct((Bp, LANES), jnp.float32),
        in_specs=[
            pl.BlockSpec((TILE_B, obs_dim), lambda i: (i, 0)),   # obs tile
            pl.BlockSpec((TILE_B, 1), lambda i: (i, 0)),         # act tile
            resident(w1b), resident(b1),
            resident(w2b), resident(b2),
            resident(w3p), resident(b3p),
        ],
        out_specs=pl.BlockSpec((TILE_B, LANES), lambda i: (i, 0)),
        compiler_params=pltpu.CompilerParams(
            dimension_semantics=("parallel",),        # megacore on v7x
            vmem_limit_bytes=32 * 1024 * 1024,        # safe on v5e..v7x
        ),
    )(obs, act, w1b, b1, w2b, b2, w3p, b3p)


def unpack_slab(slab, batch, act_dim):
    logits = slab[:batch, :act_dim]
    logp = slab[:batch, act_dim]
    entropy = slab[:batch, act_dim + 1]
    return logits, logp, entropy


def actor_forward(obs, act, params):
    """Convenience wrapper matching Actor_Net.forward(obs, act):
    returns (logits, logp, entropy). Prefer actor_forward_packed +
    unpack_slab inside a fused consumer for the hot path."""
    prepped, act_dim = prepare_params(params)
    slab = actor_forward_packed(obs, act, prepped, act_dim=act_dim)
    return unpack_slab(slab, obs.shape[0], act_dim)


def init_params(key, obs_dim, act_dim, hidden_sizes):
    """Deterministic orthogonal init (mirrors layer_init in the PyTorch code).
    Weights stored as (in_features, out_features) so the kernel does x@W + b."""
    k1, k2, k3 = jax.random.split(key, 3)
    ortho = jax.nn.initializers.orthogonal
    std = float(jnp.sqrt(2.0))
    w1 = ortho(std)(k1, (obs_dim, hidden_sizes[0]), jnp.float32)
    b1 = jnp.zeros((1, hidden_sizes[0]), jnp.float32)
    w2 = ortho(std)(k2, (hidden_sizes[0], hidden_sizes[1]), jnp.float32)
    b2 = jnp.zeros((1, hidden_sizes[1]), jnp.float32)
    w3 = ortho(0.01)(k3, (hidden_sizes[1], act_dim), jnp.float32)
    b3 = jnp.zeros((1, act_dim), jnp.float32)
    return (w1, b1, w2, b2, w3, b3)


def reference_forward(obs, act, params):
    """Pure-JAX reference (same bf16-matmul / f32-elementwise path)."""
    w1, b1, w2, b2, w3, b3 = params
    f32, bf16 = jnp.float32, jnp.bfloat16
    h1 = jnp.tanh(jnp.dot(obs.astype(bf16), w1.astype(bf16),
                          preferred_element_type=f32) + b1)
    h2 = jnp.tanh(jnp.dot(h1.astype(bf16), w2.astype(bf16),
                          preferred_element_type=f32) + b2)
    logits = jnp.dot(h2.astype(bf16), w3.astype(bf16),
                     preferred_element_type=f32) + b3
    logp_all = jax.nn.log_softmax(logits, axis=-1)
    p = jnp.exp(logp_all)
    entropy = -jnp.sum(p * logp_all, axis=-1)
    logp = jnp.take_along_axis(logp_all, act, axis=-1)[:, 0]
    return logits, logp, entropy


if __name__ == "__main__":
    key = jax.random.PRNGKey(0)
    k_obs, k_act, k_param = jax.random.split(key, 3)

    batch, obs_dim, act_dim = 8, 8, 4
    hidden_sizes = (32, 32)

    obs = jax.random.normal(k_obs, (batch, obs_dim), jnp.float32)
    act = jax.random.randint(k_act, (batch, 1), 0, act_dim, jnp.int32)
    params = init_params(k_param, obs_dim, act_dim, hidden_sizes)

    # Hot path: prep weights once, run the packed kernel, unpack lazily.
    prepped, A = prepare_params(params)
    slab = actor_forward_packed(obs, act, prepped, act_dim=A)
    jax.block_until_ready(slab)
    logits, logp, entropy = unpack_slab(slab, batch, A)

    ref_logits, ref_logp, ref_ent = reference_forward(obs, act, params)
    assert jnp.allclose(logits, ref_logits, atol=1e-3), "logits mismatch"
    assert jnp.allclose(logp, ref_logp, atol=1e-3), "logp mismatch"
    assert jnp.allclose(entropy, ref_ent, atol=2e-3), "entropy mismatch"

    # Convenience wrapper (module-equivalent signature) also works.
    logits2, logp2, ent2 = actor_forward(obs, act, params)
    assert jnp.allclose(logits2, logits), "wrapper mismatch"

    # TODO(synk): Categorical sampling (get_a) uses host RNG / argmax and is
    # left to plain JAX on top of the returned logits.
    print("KERNEL_OK")
</pallas_src>

<mosaic_0001>
module attributes {stable_mosaic.version = 11 : i64} {
  func.func @actor_kernel(%arg0: i32, %arg1: memref<16x8xbf16, #tpu.memory_space<vmem>>, %arg2: memref<16x1xi32, #tpu.memory_space<vmem>>, %arg3: memref<8x32xbf16, #tpu.memory_space<vmem>>, %arg4: memref<1x32xf32, #tpu.memory_space<vmem>>, %arg5: memref<32x32xbf16, #tpu.memory_space<vmem>>, %arg6: memref<1x32xf32, #tpu.memory_space<vmem>>, %arg7: memref<32x128xbf16, #tpu.memory_space<vmem>>, %arg8: memref<1x128xf32, #tpu.memory_space<vmem>>, %arg9: memref<16x128xf32, #tpu.memory_space<vmem>>) attributes {dimension_semantics = [#tpu.dimension_semantics<parallel>], iteration_bounds = array<i64: 1>, scalar_prefetch = 0 : i64, scratch_operands = 0 : i64, tpu.core_type = #tpu.core_type<tc>, window_params = [{transform_indices = @transform_0, window_bounds = array<i64: 16, 8>}, {transform_indices = @transform_1, window_bounds = array<i64: 16, 1>}, {pipeline_mode = #tpu.pipeline_mode<synchronous>, transform_indices = @transform_2, window_bounds = array<i64: 8, 32>}, {pipeline_mode = #tpu.pipeline_mode<synchronous>, transform_indices = @transform_3, window_bounds = array<i64: 1, 32>}, {pipeline_mode = #tpu.pipeline_mode<synchronous>, transform_indices = @transform_4, window_bounds = array<i64: 32, 32>}, {pipeline_mode = #tpu.pipeline_mode<synchronous>, transform_indices = @transform_5, window_bounds = array<i64: 1, 32>}, {pipeline_mode = #tpu.pipeline_mode<synchronous>, transform_indices = @transform_6, window_bounds = array<i64: 32, 128>}, {pipeline_mode = #tpu.pipeline_mode<synchronous>, transform_indices = @transform_7, window_bounds = array<i64: 1, 128>}, {transform_indices = @transform_8, window_bounds = array<i64: 16, 128>}]} {
    %c0 = arith.constant 0 : index
    %c0_0 = arith.constant 0 : index
    %0 = vector.load %arg1[%c0, %c0_0] : memref<16x8xbf16, #tpu.memory_space<vmem>>, vector<16x8xbf16>
    %c0_1 = arith.constant 0 : index
    %c0_2 = arith.constant 0 : index
    %1 = vector.load %arg3[%c0_1, %c0_2] : memref<8x32xbf16, #tpu.memory_space<vmem>>, vector<8x32xbf16>
    %cst = arith.constant dense<0.000000e+00> : vector<16x32xf32>
    %2 = tpu.matmul %0, %1, %cst {dimension_numbers = #tpu.dot_dimension_numbers<[1], [0], [0], [1], [0, 0, 1, 1], [], []>} : vector<16x8xbf16>, vector<8x32xbf16>, vector<16x32xf32> -> vector<16x32xf32>
    %c0_3 = arith.constant 0 : index
    %c0_4 = arith.constant 0 : index
    %3 = vector.load %arg4[%c0_3, %c0_4] : memref<1x32xf32, #tpu.memory_space<vmem>>, vector<1x32xf32>
    %4 = vector.broadcast %3 : vector<1x32xf32> to vector<16x32xf32>
    %5 = arith.addf %2, %4 : vector<16x32xf32>
    %6 = math.tanh %5 : vector<16x32xf32>
    %7 = arith.truncf %6 : vector<16x32xf32> to vector<16x32xbf16>
    %c0_5 = arith.constant 0 : index
    %c0_6 = arith.constant 0 : index
    %8 = vector.load %arg5[%c0_5, %c0_6] : memref<32x32xbf16, #tpu.memory_space<vmem>>, vector<32x32xbf16>
    %cst_7 = arith.constant dense<0.000000e+00> : vector<16x32xf32>
    %9 = tpu.matmul %7, %8, %cst_7 {dimension_numbers = #tpu.dot_dimension_numbers<[1], [0], [0], [1], [0, 0, 1, 1], [], []>} : vector<16x32xbf16>, vector<32x32xbf16>, vector<16x32xf32> -> vector<16x32xf32>
    %c0_8 = arith.constant 0 : index
    %c0_9 = arith.constant 0 : index
    %10 = vector.load %arg6[%c0_8, %c0_9] : memref<1x32xf32, #tpu.memory_space<vmem>>, vector<1x32xf32>
    %11 = vector.broadcast %10 : vector<1x32xf32> to vector<16x32xf32>
    %12 = arith.addf %9, %11 : vector<16x32xf32>
    %13 = math.tanh %12 : vector<16x32xf32>
    %14 = arith.truncf %13 : vector<16x32xf32> to vector<16x32xbf16>
    %c0_10 = arith.constant 0 : index
    %c0_11 = arith.constant 0 : index
    %15 = vector.load %arg7[%c0_10, %c0_11] : memref<32x128xbf16, #tpu.memory_space<vmem>>, vector<32x128xbf16>
    %cst_12 = arith.constant dense<0.000000e+00> : vector<16x128xf32>
    %16 = tpu.matmul %14, %15, %cst_12 {dimension_numbers = #tpu.dot_dimension_numbers<[1], [0], [0], [1], [0, 0, 1, 1], [], []>} : vector<16x32xbf16>, vector<32x128xbf16>, vector<16x128xf32> -> vector<16x128xf32>
    %c0_13 = arith.constant 0 : index
    %c0_14 = arith.constant 0 : index
    %17 = vector.load %arg8[%c0_13, %c0_14] : memref<1x128xf32, #tpu.memory_space<vmem>>, vector<1x128xf32>
    %18 = vector.broadcast %17 : vector<1x128xf32> to vector<16x128xf32>
    %19 = arith.addf %16, %18 : vector<16x128xf32>
    %cst_15 = arith.constant dense<0xFF800000> : vector<16xf32>
    %20 = vector.multi_reduction <maximumf>, %19, %cst_15 [1] : vector<16x128xf32> to vector<16xf32>
    %21 = vector.shape_cast %20 : vector<16xf32> to vector<16x1xf32>
    %22 = vector.broadcast %21 : vector<16x1xf32> to vector<16x128xf32>
    %23 = arith.subf %19, %22 : vector<16x128xf32>
    %24 = math.exp %23 : vector<16x128xf32>
    %cst_16 = arith.constant dense<0.000000e+00> : vector<16xf32>
    %25 = vector.multi_reduction <add>, %24, %cst_16 [1] : vector<16x128xf32> to vector<16xf32>
    %26 = vector.shape_cast %25 : vector<16xf32> to vector<16x1xf32>
    %27 = math.log %26 : vector<16x1xf32>
    %28 = tpu.iota {dimensions = array<i32: 1>} : vector<16x128xi32>
    %c0_17 = arith.constant 0 : index
    %c0_18 = arith.constant 0 : index
    %29 = vector.load %arg2[%c0_17, %c0_18] : memref<16x1xi32, #tpu.memory_space<vmem>>, vector<16x1xi32>
    %30 = vector.broadcast %29 : vector<16x1xi32> to vector<16x128xi32>
    %31 = arith.cmpi eq, %28, %30 : vector<16x128xi32>
    %32 = arith.extui %31 : vector<16x128xi1> to vector<16x128xi32>
    %33 = arith.sitofp %32 : vector<16x128xi32> to vector<16x128xf32>
    %34 = arith.mulf %33, %23 : vector<16x128xf32>
    %cst_19 = arith.constant dense<0.000000e+00> : vector<16xf32>
    %35 = vector.multi_reduction <add>, %34, %cst_19 [1] : vector<16x128xf32> to vector<16xf32>
    %36 = vector.shape_cast %35 : vector<16xf32> to vector<16x1xf32>
    %37 = arith.subf %36, %27 : vector<16x1xf32>
    %38 = arith.mulf %24, %23 : vector<16x128xf32>
    %cst_20 = arith.constant dense<0.000000e+00> : vector<16xf32>
    %39 = vector.multi_reduction <add>, %38, %cst_20 [1] : vector<16x128xf32> to vector<16xf32>
    %40 = vector.shape_cast %39 : vector<16xf32> to vector<16x1xf32>
    %41 = arith.divf %40, %26 : vector<16x1xf32>
    %42 = arith.subf %27, %41 : vector<16x1xf32>
    %c4_i32 = arith.constant 4 : i32
    %43 = vector.broadcast %c4_i32 : i32 to vector<16x128xi32>
    %44 = arith.cmpi slt, %28, %43 : vector<16x128xi32>
    %cst_21 = arith.constant 0.000000e+00 : f32
    %45 = vector.broadcast %cst_21 : f32 to vector<16x128xf32>
    %46 = arith.select %44, %19, %45 : vector<16x128xi1>, vector<16x128xf32>
    %c4_i32_22 = arith.constant 4 : i32
    %47 = vector.broadcast %c4_i32_22 : i32 to vector<16x128xi32>
    %48 = arith.cmpi eq, %28, %47 : vector<16x128xi32>
    %49 = vector.shape_cast %37 : vector<16x1xf32> to vector<16x1xf32>
    %50 = vector.broadcast %49 : vector<16x1xf32> to vector<16x128xf32>
    %51 = arith.select %48, %50, %46 : vector<16x128xi1>, vector<16x128xf32>
    %c5_i32 = arith.constant 5 : i32
    %52 = vector.broadcast %c5_i32 : i32 to vector<16x128xi32>
    %53 = arith.cmpi eq, %28, %52 : vector<16x128xi32>
    %54 = vector.shape_cast %42 : vector<16x1xf32> to vector<16x1xf32>
    %55 = vector.broadcast %54 : vector<16x1xf32> to vector<16x128xf32>
    %56 = arith.select %53, %55, %51 : vector<16x128xi1>, vector<16x128xf32>
    %c0_23 = arith.constant 0 : index
    %c0_24 = arith.constant 0 : index
    %57 = vector.load %arg9[%c0_23, %c0_24] : memref<16x128xf32, #tpu.memory_space<vmem>>, vector<16x128xf32>
    tpu.vector_store %arg9[%c0_23, %c0_24], %56 {strides = array<i32>} : memref<16x128xf32, #tpu.memory_space<vmem>>, vector<16x128xf32>,
    return
  }
  func.func @transform_0(%arg0: i32) -> (i32, i32) {
    %c0_i32 = arith.constant 0 : i32
    %c0_i32_0 = arith.constant 0 : i32
    return %arg0, %c0_i32 : i32, i32
  }
  func.func @transform_1(%arg0: i32) -> (i32, i32) {
    %c0_i32 = arith.constant 0 : i32
    %c0_i32_0 = arith.constant 0 : i32
    return %arg0, %c0_i32 : i32, i32
  }
  func.func @transform_2(%arg0: i32) -> (i32, i32) {
    %c0_i32 = arith.constant 0 : i32
    %c0_i32_0 = arith.constant 0 : i32
    %c0_i32_1 = arith.constant 0 : i32
    return %c0_i32, %c0_i32_0 : i32, i32
  }
  func.func @transform_3(%arg0: i32) -> (i32, i32) {
    %c0_i32 = arith.constant 0 : i32
    %c0_i32_0 = arith.constant 0 : i32
    %c0_i32_1 = arith.constant 0 : i32
    return %c0_i32, %c0_i32_0 : i32, i32
  }
  func.func @transform_4(%arg0: i32) -> (i32, i32) {
    %c0_i32 = arith.constant 0 : i32
    %c0_i32_0 = arith.constant 0 : i32
    %c0_i32_1 = arith.constant 0 : i32
    return %c0_i32, %c0_i32_0 : i32, i32
  }
  func.func @transform_5(%arg0: i32) -> (i32, i32) {
    %c0_i32 = arith.constant 0 : i32
    %c0_i32_0 = arith.constant 0 : i32
    %c0_i32_1 = arith.constant 0 : i32
    return %c0_i32, %c0_i32_0 : i32, i32
  }
  func.func @transform_6(%arg0: i32) -> (i32, i32) {
    %c0_i32 = arith.constant 0 : i32
    %c0_i32_0 = arith.constant 0 : i32
    %c0_i32_1 = arith.constant 0 : i32
    return %c0_i32, %c0_i32_0 : i32, i32
  }
  func.func @transform_7(%arg0: i32) -> (i32, i32) {
    %c0_i32 = arith.constant 0 : i32
    %c0_i32_0 = arith.constant 0 : i32
    %c0_i32_1 = arith.constant 0 : i32
    return %c0_i32, %c0_i32_0 : i32, i32
  }
  func.func @transform_8(%arg0: i32) -> (i32, i32) {
    %c0_i32 = arith.constant 0 : i32
    %c0_i32_0 = arith.constant 0 : i32
    return %arg0, %c0_i32 : i32, i32
  }
}

</mosaic_0001>

<llo_original>
// kernel: actor_forward_packed.1
$region0: #{actor_forward_packed.1}
  #allocation0 [shape = 'u32[]', space=smem, size = 0x4, offset = 0x4, fixed_abs, tag = 'smem constant byte address 0x4 - core index']
  #allocation1 [shape = 'u32[72,128]{1,0:T(1,128)}', space=vmem, size = 0x9000, scoped, tag = 'internal scratch']
  %s0 = inlined_call_operand.vmem [shape: bf16[16,8], index: 0, kind: input, shape index: {}]
  %s1 = inlined_call_operand.vmem [shape: s32[16,1], index: 1, kind: input, shape index: {}]
  %s2 = inlined_call_operand.vmem [shape: bf16[8,32], index: 2, kind: input, shape index: {}]
  %s3 = inlined_call_operand.vmem [shape: f32[1,32], index: 3, kind: input, shape index: {}]
  %s4 = inlined_call_operand.vmem [shape: bf16[32,32], index: 4, kind: input, shape index: {}]
  %s5 = inlined_call_operand.vmem [shape: f32[1,32], index: 5, kind: input, shape index: {}]
  %s6 = inlined_call_operand.vmem [shape: bf16[32,128], index: 6, kind: input, shape index: {}]
  %s7 = inlined_call_operand.vmem [shape: f32[1,128], index: 7, kind: input, shape index: {}]
  %s8 = inlined_call_operand.hbm [shape: f32[16,128], index: 8, kind: output, shape index: {}]
  %s9 = sld [smem:[#allocation0]]
  $region42: #{actor_forward_packed.1} parent=0
    _
  %s11 = ssub.s32 1, %s9
  %s12 = scalar_select 0, %s11, %s9
  $region1: #{actor_forward_packed.1} parent=0
    #allocation2 [shape = 'u8[8192]{0}', space=vmem, size = 0x2000, scoped, tag = 'output window, operand 0, single buffered']
    #allocation3 [shape = 's32[1]{0}', space=sflag, size = 0x4, scoped, tag = 'scoped memory for actor_forward_packed.1']
    %13 = vsyncpa [#allocation3], 0
    // Predicated region
    $region2: #{actor_forward_packed.1} parent=1 // pred_check
      _
    $region3: #{actor_forward_packed.1} parent=1 // pred_check_branch
      %15 = sbr.rel (0) target = $region5
    $region4: #{actor_forward_packed.1} parent=1 // pred_region
      _
    $region5: #{actor_forward_packed.1} parent=1 // pred_fallthru
      _
    // Predicated region
    $region6: #{actor_forward_packed.1} parent=1 // pred_check
      _
    $region7: #{actor_forward_packed.1} parent=1 // pred_check_branch
      %17 = sbr.rel (0) target = $region9
    $region8: #{actor_forward_packed.1} parent=1 // pred_region
      _
    $region9: #{actor_forward_packed.1} parent=1 // pred_fallthru
      _
    // Predicated region
    $region10: #{actor_forward_packed.1} parent=1 // pred_check
      _
    $region11: #{actor_forward_packed.1} parent=1 // pred_check_branch
      %19 = sbr.rel (0) target = $region13
    $region12: #{actor_forward_packed.1} parent=1 // pred_region
      _
    $region13: #{actor_forward_packed.1} parent=1 // pred_fallthru
      _
    // Predicated region
    $region14: #{actor_forward_packed.1} parent=1 // pred_check
      _
    $region15: #{actor_forward_packed.1} parent=1 // pred_check_branch
      %21 = sbr.rel (0) target = $region17
    $region16: #{actor_forward_packed.1} parent=1 // pred_region
      _
    $region17: #{actor_forward_packed.1} parent=1 // pred_fallthru
      _
    // Predicated region
    $region18: #{actor_forward_packed.1} parent=1 // pred_check
      _
    $region19: #{actor_forward_packed.1} parent=1 // pred_check_branch
      %23 = sbr.rel (0) target = $region21
    $region20: #{actor_forward_packed.1} parent=1 // pred_region
      _
    $region21: #{actor_forward_packed.1} parent=1 // pred_fallthru
      _
    // Predicated region
    $region22: #{actor_forward_packed.1} parent=1 // pred_check
      _
    $region23: #{actor_forward_packed.1} parent=1 // pred_check_branch
      %25 = sbr.rel (0) target = $region25
    $region24: #{actor_forward_packed.1} parent=1 // pred_region
      _
    $region25: #{actor_forward_packed.1} parent=1 // pred_fallthru
      _
    // Predicated region
    $region26: #{actor_forward_packed.1} parent=1 // pred_check
      _
    $region27: #{actor_forward_packed.1} parent=1 // pred_check_branch
      %27 = sbr.rel (0) target = $region29
    $region28: #{actor_forward_packed.1} parent=1 // pred_region
      _
    $region29: #{actor_forward_packed.1} parent=1 // pred_fallthru
      _
    // Predicated region
    $region30: #{actor_forward_packed.1} parent=1 // pred_check
      _
    $region31: #{actor_forward_packed.1} parent=1 // pred_check_branch
      %29 = sbr.rel (0) target = $region33
    $region32: #{actor_forward_packed.1} parent=1 // pred_region
      _
    $region33: #{actor_forward_packed.1} parent=1 // pred_fallthru
      _
    %v31 = vld [vmem:[%s0] sm:$0xf]
    %v32 = vld [vmem:[%s0 + $0x4] sm:$0xf]
    %v33 = vld [vmem:[%s2] sm:$0xf]
    %v34 = vld [vmem:[%s3] sm:$0x1]
    %v36 = vperm.slane %v34, 0
    %v40 = vunpack.c.l.b16 %v31
    %v41 = vunpack.c.l.b16 %v32
    %v42 = vpack.c.b16 %v41, %v40
    %vm43 = vcmask 64512
    %v45 = vsel %vm43, %v42, 0
    %vm47 = vcmask 1043456
    %v49 = vsel %vm47, %v33, 0
    %51 = vmatpush.bf16.msra.mxu0 0
    %52 = vmatpush.bf16.msra.mxu0 0
    %53 = vmatpush.bf16.msra.mxu0 0
    %54 = vmatpush.bf16.msra.mxu0 0
    %55 = vmatpush.bf16.msra.mxu0 0
    %56 = vmatpush.bf16.msra.mxu0 0
    %57 = vmatpush.bf16.msra.mxu0 0
    %58 = vmatpush.bf16.msra.mxu0 %v49
    %59 = vmatmul.bf16.gmra.mxu0 %v45
    %v60 = vpop.f32.mrf.mxu0
    %v61 = vadd.f32 %v36, %v60
    %v62 = vpop.f32.mrf.mxu0
    %v63 = vadd.f32 %v36, %v62
    %64 = vdwg.mxu0
    %v65 = vtanh.pop %v61
    %v66 = vtanh.pop %v63
    %v67 = vpack.c.bf16 %v66, %v65
    %v68 = vld [vmem:[%s4] sm:$0xf]
    %v69 = vld [vmem:[%s4 + $0x4] sm:$0xf]
    %v70 = vld [vmem:[%s4 + $0x8] sm:$0xf]
    %v71 = vld [vmem:[%s4 + $0xc] sm:$0xf]
    %v72 = vld [vmem:[%s5] sm:$0x1]
    %v74 = vperm.slane %v72, 0
    %v80 = vunpack.c.l.b16 %v68
    %v81 = vunpack.c.l.b16 %v69
    %v82 = vunpack.c.l.b16 %v70
    %v83 = vunpack.c.l.b16 %v71
    %v84 = vpack.c.b16 %v81, %v80
    %v85 = vpack.c.b16 %v83, %v82
    %vm88 = vcmask 261120
    %v90 = vsel %vm88, %v67, 0
    %92 = vmatpush.bf16.msra.mxu0 0
    %93 = vmatpush.bf16.msra.mxu0 0
    %94 = vmatpush.bf16.msra.mxu0 0
    %95 = vmatpush.bf16.msra.mxu0 0
    %96 = vmatpush.bf16.msra.mxu0 0
    %97 = vmatpush.bf16.msra.mxu0 0
    %98 = vmatpush.bf16.msra.mxu0 %v85
    %99 = vmatpush.bf16.msra.mxu0 %v84
    %100 = vmatmul.bf16.gmra.mxu0 %v90
    %v101 = vpop.f32.mrf.mxu0
    %v102 = vadd.f32 %v74, %v101
    %v103 = vpop.f32.mrf.mxu0
    %v104 = vadd.f32 %v74, %v103
    %105 = vdwg.mxu0
    %v106 = vtanh.pop %v102
    %v107 = vtanh.pop %v104
    %v108 = vpack.c.bf16 %v107, %v106
    %v109 = vld [vmem:[%s6] sm:$0xf]
    %v110 = vld [vmem:[%s6 + $0x4] sm:$0xf]
    %v111 = vld [vmem:[%s6 + $0x8] sm:$0xf]
    %v112 = vld [vmem:[%s6 + $0xc] sm:$0xf]
    %v113 = vld [vmem:[%s7] sm:$0x1]
    %v115 = vperm.slane %v113, 0
    %v121 = vunpack.c.l.b16 %v109
    %v122 = vunpack.c.l.b16 %v110
    %v123 = vunpack.c.l.b16 %v111
    %v124 = vunpack.c.l.b16 %v112
    %v125 = vpack.c.b16 %v122, %v121
    %v126 = vpack.c.b16 %v124, %v123
    %v130 = vsel %vm88, %v108, 0
    %132 = vmatpush.bf16.msra.mxu0 0
    %133 = vmatpush.bf16.msra.mxu0 0
    %134 = vmatpush.bf16.msra.mxu0 0
    %135 = vmatpush.bf16.msra.mxu0 0
    %136 = vmatpush.bf16.msra.mxu0 0
    %137 = vmatpush.bf16.msra.mxu0 0
    %138 = vmatpush.bf16.msra.mxu0 %v126
    %139 = vmatpush.bf16.msra.mxu0 %v125
    %140 = vmatmul.bf16.gmra.mxu0 %v130
    %v141 = vpop.f32.mrf.mxu0
    %v142 = vadd.f32 %v115, %v141
    %v143 = vpop.f32.mrf.mxu0
    %v144 = vadd.f32 %v115, %v143
    %145 = vdwg.mxu0
    %146 = vmax.xlane.f32.xlu0 %v142
    %v147 = vpop.xlane.xlu0 %146
    %148 = vmax.xlane.f32.xlu0 %v144
    %v149 = vpop.xlane.xlu0 %148
    %v150 = vsub.f32 %v142, %v147
    %v151 = vsub.f32 %v144, %v149
    %v152 = vmul.f32 %v150, 1.442695
    %v153 = vpow.pop %v152
    %v154 = vmul.f32 %v151, 1.442695
    %v155 = vpow.pop %v154
    %156 = vadd.xlane.f32.xlu0 %v153
    %v157 = vpop.xlane.xlu0 %156
    %158 = vadd.xlane.f32.xlu0 %v155
    %v159 = vpop.xlane.xlu0 %158
    %v160 = vlog2.pop %v157
    %v161 = vmul.f32 %v160, 0.6931472
    %v162 = vlog2.pop %v159
    %v163 = vmul.f32 %v162, 0.6931472
    %v164 = vlaneseq
    %v165 = vand.u32 %v164, 127
    %v166 = vld [vmem:[%s1] sm:$0xff]
    %v167 = vld [vmem:[%s1 + $0x8] sm:$0xff]
    %168 = vset.pattern.permute.xlu0 0
    %169 = vperm.xlu0 %168, %v166
    %v170 = vpop.permute.xlu0 %169
    %171 = vset.pattern.permute.xlu0 0
    %172 = vperm.xlu0 %171, %v167
    %v173 = vpop.permute.xlu0 %172
    %vm174 = vcmp.eq.s32.totalorder %v165, %v170
    %vm175 = vcmp.eq.s32.totalorder %v165, %v173
    %v176 = vsel %vm174, 1, 0
    %v177 = vsel %vm175, 1, 0
    %v178 = vcvt.s32.f32 %v176
    %v179 = vcvt.s32.f32 %v177
    %v180 = vmul.f32 %v178, %v150
    %v181 = vmul.f32 %v179, %v151
    %182 = vadd.xlane.f32.xlu0 %v180
    %v183 = vpop.xlane.xlu0 %182
    %184 = vadd.xlane.f32.xlu0 %v181
    %v185 = vpop.xlane.xlu0 %184
    %v186 = vsub.f32 %v183, %v161
    %v187 = vsub.f32 %v185, %v163
    %v188 = vmul.f32 %v153, %v150
    %v189 = vmul.f32 %v155, %v151
    %190 = vadd.xlane.f32.xlu0 %v188
    %v191 = vpop.xlane.xlu0 %190
    %192 = vadd.xlane.f32.xlu0 %v189
    %v193 = vpop.xlane.xlu0 %192
    %v194 = vrcp.pop %v157
    %v195 = vmul.f32 %v157, %v194
    %v196 = vsub.f32 1.0, %v195
    %v197 = vmul.f32 %v194, %v196
    %v198 = vadd.f32 %v194, %v197
    %vm199 = vweird.f32 %v157
    %vm200 = vweird.f32 %v194
    %vm201 = vmor %vm199, %vm200
    %v202 = vsel %vm201, %v194, %v198
    %v203 = vand.u32 2147483647, %v157
    %vm204 = vcmp.eq.f32.partialorder %v203, 8.507059e+37
    %v205 = vand.u32 %v157, 2147483648
    %v206 = vor.u32 1.1754944e-38, %v205
    %v207 = vsel %vm204, %v206, %v202
    %v208 = vmul.f32 %v191, %v207
    %v209 = vrcp.pop %v159
    %v210 = vmul.f32 %v159, %v209
    %v211 = vsub.f32 1.0, %v210
    %v212 = vmul.f32 %v209, %v211
    %v213 = vadd.f32 %v209, %v212
    %vm214 = vweird.f32 %v159
    %vm215 = vweird.f32 %v209
    %vm216 = vmor %vm214, %vm215
    %v217 = vsel %vm216, %v209, %v213
    %v218 = vand.u32 2147483647, %v159
    %vm219 = vcmp.eq.f32.partialorder %v218, 8.507059e+37
    %v220 = vand.u32 %v159, 2147483648
    %v221 = vor.u32 1.1754944e-38, %v220
    %v222 = vsel %vm219, %v221, %v217
    %v223 = vmul.f32 %v193, %v222
    %v224 = vsub.f32 %v161, %v208
    %v225 = vsub.f32 %v163, %v223
    %vm226 = vcmp.lt.s32.totalorder %v165, 4
    %v227 = vsel %vm226, %v142, 0.0
    %v228 = vsel %vm226, %v144, 0.0
    %vm229 = vcmp.eq.s32.totalorder %v165, 4
    %v230 = vsel %vm229, %v186, %v227
    %v231 = vsel %vm229, %v187, %v228
    %vm232 = vcmp.eq.s32.totalorder %v165, 5
    %v233 = vsel %vm232, %v224, %v230
    %v234 = vsel %vm232, %v225, %v231
    %235 = vst [vmem:[#allocation2] sm:$0xff] %v233
    %236 = vst [vmem:[#allocation2 + $0x8] sm:$0xff] %v234
    // Predicated region
    $region34: #{actor_forward_packed.1} parent=1 // pred_check
      _
    $region35: #{actor_forward_packed.1} parent=1 // pred_check_branch
      %238 = sbr.rel (0) target = $region37
    $region36: #{actor_forward_packed.1} parent=1 // pred_region
      %240 = vsyncadd [#allocation3], 0
      %s241 = sshll.u32 [#allocation2], 4
      %s242 = int_to_ptr.vmem [resolvable:$true] %s241
      %s243 = sshll.u32 %s8, 4
      %s244 = int_to_ptr.hbm [resolvable:$true] %s243
      %249 = dma.vmem_to_hbm [thread:$0]  %s242, 256, %s244, [#allocation3], 128, 128, 8
    $region37: #{actor_forward_packed.1} parent=1 // pred_fallthru
      _
    // Predicated region
    $region38: #{actor_forward_packed.1} parent=1 // pred_check
      _
    $region39: #{actor_forward_packed.1} parent=1 // pred_check_branch
      %251 = sbr.rel (0) target = $region41
    $region40: #{actor_forward_packed.1} parent=1 // pred_region
      %253 = dma.done [#allocation3], 256
    $region41: #{actor_forward_packed.1} parent=1 // pred_fallthru
      _
    %254 = vsyncpa [#allocation3], 1

</llo_original>
